<compile_context>
chip_gen: v7x
topology: tpu7x:2x2x1
jax: 0.10.0
libtpu: 0.0.40
codegen_flags: <defaults>
</compile_context>

<pallas_src>
import jax
import jax.numpy as jnp
from jax.experimental import pallas as pl
from jax.experimental.pallas import tpu as pltpu

LANE = 128
TARGET_BLOCK_BYTES = 2 << 20  # ~2 MiB per block per array


def _make_rezero_kernel(fn):
    def rezero_kernel(g_ref, x_ref, o_ref):
        # g_ref lives in SMEM: scalar rezero gate (f32).
        g = g_ref[0, 0]
        # NOTE: for a partial last block the out-of-range rows contain garbage
        # values; fn is applied to them but the stores are masked by Pallas,
        # so they never reach HBM (harmless even if fn produces inf/nan).
        o_ref[...] = (fn(x_ref[...]) * g).astype(o_ref.dtype)
    return rezero_kernel


def _pick_width(n):
    """Widest lane-dense slab width (multiple of 128) that divides n."""
    for w in (8 * LANE, 4 * LANE, 2 * LANE, LANE):
        if n % w == 0:
            return w, 0
    return LANE, (-n) % LANE


def _pick_block_rows(rows, width, itemsize):
    """~2 MiB blocks, rows a multiple of 16 (bf16-safe), or the full dim."""
    target = max(16, (TARGET_BLOCK_BYTES // (width * itemsize)) // 16 * 16)
    if rows <= target:
        return rows          # full second-to-last dim: always a legal block
    return target


def rezero_forward(x, g, fn=lambda v: v):
    """Computes fn(x) * g with the elementwise math inside a Pallas kernel.

    x : arbitrary-shaped float array (e.g. NCHW activations)
    g : scalar parameter (shape (1,) like torch.zeros(1), or a 0-d scalar)
    """
    orig_shape = x.shape
    orig_dtype = x.dtype
    n = x.size
    itemsize = jnp.dtype(orig_dtype).itemsize

    width, n_pad = _pick_width(n)
    flat = x.reshape(-1)
    if n_pad:
        # Rare path: only when x.size is not a multiple of 128.
        flat = jnp.pad(flat, (0, n_pad))
    x2d = flat.reshape(-1, width)             # lane-dense 2-D slab
    rows = x2d.shape[0]

    block_rows = _pick_block_rows(rows, width, itemsize)
    grid = (pl.cdiv(rows, block_rows),)

    g_smem = jnp.asarray(g, jnp.float32).reshape(1, 1)

    out2d = pl.pallas_call(
        _make_rezero_kernel(fn),
        out_shape=jax.ShapeDtypeStruct((rows, width), orig_dtype),
        grid=grid,
        in_specs=[
            pl.BlockSpec(memory_space=pltpu.MemorySpace.SMEM),        # g (1,1)
            pl.BlockSpec((block_rows, width), lambda i: (i, 0)),      # x tile
        ],
        out_specs=pl.BlockSpec((block_rows, width), lambda i: (i, 0)),
        # x (input index 1) aliases output 0: same shape/dtype, elementwise.
        input_output_aliases={1: 0},
        compiler_params=pltpu.CompilerParams(
            dimension_semantics=("parallel",)),
    )(g_smem, x2d)

    if n_pad:
        out = out2d.reshape(-1)[:n].reshape(orig_shape)
    else:
        out = out2d.reshape(orig_shape)
    return out


if __name__ == "__main__":
    key = jax.random.PRNGKey(0)

    # --- Test 1: small NCHW activations, g == 0 (torch.zeros(1) init) -------
    x = jax.random.normal(key, (2, 4, 16, 16), dtype=jnp.float32)
    g = jnp.zeros((1,), dtype=jnp.float32)
    out = jax.block_until_ready(rezero_forward(x, g, fn=jnp.tanh))
    ref = jnp.tanh(x) * g[0]
    assert out.shape == x.shape and out.dtype == x.dtype
    assert jnp.allclose(out, ref, atol=1e-6)

    # --- Test 2: nonzero gate, identity fn ----------------------------------
    g2 = jnp.array([0.5], dtype=jnp.float32)
    out2 = jax.block_until_ready(rezero_forward(x, g2, fn=lambda v: v))
    assert jnp.allclose(out2, x * 0.5, atol=1e-6)

    # --- Test 3: larger activation exercising the multi-block (grid>1) path --
    k3 = jax.random.PRNGKey(1)
    x3 = jax.random.normal(k3, (8, 64, 64, 64), dtype=jnp.float32)   # 8 MiB
    g3 = jnp.array([0.3], dtype=jnp.float32)
    out3 = jax.block_until_ready(rezero_forward(x3, g3, fn=jnp.tanh))
    assert jnp.allclose(out3, jnp.tanh(x3) * 0.3, atol=1e-5)

    # --- Test 4: bf16 input with a size not divisible by 128 (pad path) ------
    k4 = jax.random.PRNGKey(2)
    x4 = jax.random.normal(k4, (2, 3, 7, 11), dtype=jnp.bfloat16)
    g4 = jnp.array([1.25], dtype=jnp.float32)
    out4 = jax.block_until_ready(rezero_forward(x4, g4, fn=lambda v: v))
    ref4 = (x4.astype(jnp.float32) * 1.25).astype(jnp.bfloat16)
    assert out4.dtype == jnp.bfloat16
    assert jnp.allclose(out4.astype(jnp.float32), ref4.astype(jnp.float32),
                        atol=1e-2, rtol=1e-2)

    print("KERNEL_OK")
</pallas_src>

<mosaic_0001>
module attributes {stable_mosaic.version = 11 : i64} {
  func.func @rezero_kernel(%arg0: i32, %arg1: memref<1x1xf32, #tpu.memory_space<smem>>, %arg2: memref<2x1024xf32, #tpu.memory_space<vmem>>, %arg3: memref<2x1024xf32, #tpu.memory_space<vmem>>) attributes {dimension_semantics = [#tpu.dimension_semantics<parallel>], iteration_bounds = array<i64: 1>, scalar_prefetch = 0 : i64, scratch_operands = 0 : i64, tpu.core_type = #tpu.core_type<tc>, window_params = [{transform_indices = @transform_0, window_bounds = array<i64: 1, 1>}, {transform_indices = @transform_1, window_bounds = array<i64: 2, 1024>}, {transform_indices = @transform_2, window_bounds = array<i64: 2, 1024>}]} {
    %c0 = arith.constant 0 : index
    %c0_0 = arith.constant 0 : index
    %0 = memref.load %arg1[%c0, %c0_0] : memref<1x1xf32, #tpu.memory_space<smem>>
    %c0_1 = arith.constant 0 : index
    %c0_2 = arith.constant 0 : index
    %1 = vector.load %arg2[%c0_1, %c0_2] : memref<2x1024xf32, #tpu.memory_space<vmem>>, vector<2x1024xf32>
    %2 = math.tanh %1 : vector<2x1024xf32>
    %3 = vector.broadcast %0 : f32 to vector<2x1024xf32>
    %4 = arith.mulf %2, %3 : vector<2x1024xf32>
    %c0_3 = arith.constant 0 : index
    %c0_4 = arith.constant 0 : index
    %5 = vector.load %arg3[%c0_3, %c0_4] : memref<2x1024xf32, #tpu.memory_space<vmem>>, vector<2x1024xf32>
    tpu.vector_store %arg3[%c0_3, %c0_4], %4 {strides = array<i32>} : memref<2x1024xf32, #tpu.memory_space<vmem>>, vector<2x1024xf32>,
    return
  }
  func.func @transform_0(%arg0: i32) -> (i32, i32) {
    %c0_i32 = arith.constant 0 : i32
    %c0_i32_0 = arith.constant 0 : i32
    %c0_i32_1 = arith.constant 0 : i32
    return %c0_i32, %c0_i32_0 : i32, i32
  }
  func.func @transform_1(%arg0: i32) -> (i32, i32) {
    %c0_i32 = arith.constant 0 : i32
    %c0_i32_0 = arith.constant 0 : i32
    return %arg0, %c0_i32 : i32, i32
  }
  func.func @transform_2(%arg0: i32) -> (i32, i32) {
    %c0_i32 = arith.constant 0 : i32
    %c0_i32_0 = arith.constant 0 : i32
    return %arg0, %c0_i32 : i32, i32
  }
}

</mosaic_0001>

<llo_original>
// kernel: tpu_custom_call.1
$region0: #{tpu_custom_call.1}
  #allocation0 [shape = 'u32[]', space=smem, size = 0x4, offset = 0x4, fixed_abs, tag = 'smem constant byte address 0x4 - core index']
  #allocation1 [shape = 'u32[144,128]{1,0:T(1,128)}', space=vmem, size = 0x12000, scoped, tag = 'internal scratch']
  #allocation2 [shape = 'f32[1,1]{1,0:T(1,128)S(6)}', space=smem, size = 0x200, scoped, tag = 'scoped memory for tpu_custom_call.1']
  %s0 = inlined_call_operand.<no memory space> [shape: f32[1,1], index: 0, kind: input, shape index: {}]
  %s1 = inlined_call_operand.hbm [shape: f32[2,1024], index: 1, kind: input, shape index: {}, may-alias: {1,2}]
  %s2 = inlined_call_operand.hbm [shape: f32[2,1024], index: 2, kind: output, shape index: {}, may-alias: {1,2}]
  %s3 = sld [smem:[#allocation0]]
  $region22: #{tpu_custom_call.1} parent=0
    _
  %s5 = ssub.s32 1, %s3
  %s6 = scalar_select 0, %s5, %s3
  %7 = sst [smem:[#allocation2]] %s0
  $region1: #{tpu_custom_call.1} parent=0
    #allocation3 [shape = 'u8[8192]{0}', space=vmem, size = 0x2000, scoped, tag = 'input window, operand 1, single buffered']
    #allocation4 [shape = 's32[1]{0}', space=sflag, size = 0x4, scoped, tag = 'scoped memory for tpu_custom_call.1']
    #allocation5 [shape = 's32[1]{0}', space=sflag, size = 0x4, scoped, tag = 'scoped memory for tpu_custom_call.1']
    #allocation6 [shape = 'u8[8192]{0}', space=vmem, size = 0x2000, scoped, tag = 'output window, operand 0, single buffered']
    %8 = vsyncpa [#allocation4], 0
    %9 = vsyncpa [#allocation5], 0
    // Predicated region
    $region2: #{tpu_custom_call.1} parent=1 // pred_check
      _
    $region3: #{tpu_custom_call.1} parent=1 // pred_check_branch
      %11 = sbr.rel (0) target = $region5
    $region4: #{tpu_custom_call.1} parent=1 // pred_region
      _
    $region5: #{tpu_custom_call.1} parent=1 // pred_fallthru
      _
    // Predicated region
    $region6: #{tpu_custom_call.1} parent=1 // pred_check
      _
    $region7: #{tpu_custom_call.1} parent=1 // pred_check_branch
      %13 = sbr.rel (0) target = $region9
    $region8: #{tpu_custom_call.1} parent=1 // pred_region
      %s15 = ssub.s32 256, 256
      %16 = vsyncadd [#allocation4], %s15
      %s18 = sshll.u32 [#allocation3], 4
      %s19 = int_to_ptr.vmem [resolvable:$true] %s18
      %21 = dma.hbm_to_vmem [thread:$0]  %s1, 256, %s19, [#allocation4]
    $region9: #{tpu_custom_call.1} parent=1 // pred_fallthru
      _
    // Predicated region
    $region10: #{tpu_custom_call.1} parent=1 // pred_check
      _
    $region11: #{tpu_custom_call.1} parent=1 // pred_check_branch
      %23 = sbr.rel (0) target = $region13
    $region12: #{tpu_custom_call.1} parent=1 // pred_region
      %24 = dma.done [#allocation4], 256
    $region13: #{tpu_custom_call.1} parent=1 // pred_fallthru
      _
    %s25 = sld [smem:[#allocation2]]
    %v26 = vld [vmem:[#allocation3] sm:$0xff]
    %v27 = vld [vmem:[#allocation3 + $0x8] sm:$0xff]
    %v28 = vtanh.pop %v26
    %v29 = vtanh.pop %v27
    %v30 = vstv %s25
    %v31 = vmul.f32 %v28, %v30
    %v32 = vmul.f32 %v29, %v30
    %33 = vst [vmem:[#allocation6] sm:$0xff] %v31
    %34 = vst [vmem:[#allocation6 + $0x8] sm:$0xff] %v32
    // Predicated region
    $region14: #{tpu_custom_call.1} parent=1 // pred_check
      _
    $region15: #{tpu_custom_call.1} parent=1 // pred_check_branch
      %36 = sbr.rel (0) target = $region17
    $region16: #{tpu_custom_call.1} parent=1 // pred_region
      %s38 = ssub.s32 256, 256
      %39 = vsyncadd [#allocation5], %s38
      %s41 = sshll.u32 [#allocation6], 4
      %s42 = int_to_ptr.vmem [resolvable:$true] %s41
      %44 = dma.vmem_to_hbm [thread:$0]  %s42, 256, %s2, [#allocation5]
    $region17: #{tpu_custom_call.1} parent=1 // pred_fallthru
      _
    // Predicated region
    $region18: #{tpu_custom_call.1} parent=1 // pred_check
      _
    $region19: #{tpu_custom_call.1} parent=1 // pred_check_branch
      %46 = sbr.rel (0) target = $region21
    $region20: #{tpu_custom_call.1} parent=1 // pred_region
      %47 = dma.done [#allocation5], 256
    $region21: #{tpu_custom_call.1} parent=1 // pred_fallthru
      _
    %48 = vsyncpa [#allocation4], 1
    %49 = vsyncpa [#allocation5], 1

</llo_original>
